<compile_context>
chip_gen: v5e
topology: v5e:2x2
jax: 0.10.0
libtpu: 0.0.40
codegen_flags: <defaults>
</compile_context>

<pallas_src>
import functools

import jax
import jax.numpy as jnp
from jax.experimental import pallas as pl
from jax.experimental.pallas import tpu as pltpu


@functools.lru_cache(maxsize=None)
def _roll_matches_np_roll():
    """One-time (cached) probe of pltpu.roll's shift convention.

    Returns True iff pltpu.roll(x, s, axis)[i] == x[(i - s) % n], i.e. the
    np.roll convention.  Used to pick the sign of the static tap shifts.
    """
    def probe(x_ref, o_ref):
        o_ref[...] = pltpu.roll(x_ref[...], 1, axis=1)

    x = jnp.arange(128, dtype=jnp.float32).reshape(1, 128)
    y = pl.pallas_call(
        probe, out_shape=jax.ShapeDtypeStruct((1, 128), jnp.float32))(x)
    return float(jax.device_get(y)[0, 0]) == 127.0


def _make_fused_kernel(H, W, L, shift_sign):
    """Fused conv1->relu->conv2->relu->conv3->sigmoid on (C, L) activations."""
    # Static per-tap lane shift and (dh, dw) for mask selection.
    taps = []
    for kh in range(3):
        for kw in range(3):
            dh, dw = kh - 1, kw - 1
            off = dh * W + dw                       # tap at lane i reads x[i + off]
            taps.append(((shift_sign * off) % L, dh, dw))

    def kernel(x_ref, w1_ref, b1_ref, w2_ref, b2_ref, w3_ref, b3_ref, o_ref):
        # Edge-validity masks along the fused lane axis.  They implement SAME
        # zero-padding and simultaneously zero the roll wrap-around and any
        # bleed between images in the batch-folded layout.
        lane = jax.lax.broadcasted_iota(jnp.int32, (1, L), 1)
        col = lane % W
        row = (lane // W) % H
        col_mask = {-1: col >= 1, 0: None, 1: col <= W - 2}
        row_mask = {-1: row >= 1, 0: None, 1: row <= H - 2}

        tap_masks = []
        for _, dh, dw in taps:
            m = None
            for part in (row_mask[dh], col_mask[dw]):
                if part is not None:
                    m = part if m is None else jnp.logical_and(m, part)
            tap_masks.append(None if m is None else m.astype(jnp.float32))

        def conv3x3(x, w_ref, b_ref, act):
            # x: (Cin, L) f32, w_ref: (9, Cout, Cin), b_ref: (Cout, 1).
            # Roll-and-accumulate: each tap is produced and consumed at once,
            # so no patch matrix or long-lived tap values.
            acc = None
            for k, (shift, _, _) in enumerate(taps):
                t = x if shift == 0 else pltpu.roll(x, shift, axis=1)
                if tap_masks[k] is not None:
                    t = t * tap_masks[k]
                part = jnp.dot(w_ref[k], t, preferred_element_type=jnp.float32)
                acc = part if acc is None else acc + part
            return act(acc + b_ref[...])            # bias broadcasts along lanes

        relu = lambda v: jnp.maximum(v, 0.0)
        x = x_ref[...].astype(jnp.float32)                  # (3,  L)
        y = conv3x3(x, w1_ref, b1_ref, relu)                # (16, L)
        y = conv3x3(y, w2_ref, b2_ref, relu)                # (32, L)
        y = conv3x3(y, w3_ref, b3_ref, jax.nn.sigmoid)      # (3,  L)
        o_ref[...] = y.astype(o_ref.dtype)                  # lane-dense store

    return kernel


def _pack_w(w_hwio):
    """(3,3,Cin,Cout) HWIO -> (9, Cout, Cin); tap-major (kh, kw) leading axis."""
    kh, kw, cin, cout = w_hwio.shape
    return jnp.transpose(w_hwio, (0, 1, 3, 2)).reshape(kh * kw, cout, cin)


def mask_weighs_forward(x_nchw, params):
    """Pallas implementation of MaskWeighs.forward (NCHW in, NCHW out)."""
    w1, b1, w2, b2, w3, b3 = params
    N, C, H, W = x_nchw.shape
    HW = H * W
    L = N * HW                                   # fused lane axis (multiple of 128)

    # (N,C,H,W) -> (C, N*H*W): channels on sublanes, batch folded into lanes.
    # This is the only (tiny) relayout; input/output of the kernel stay lane-dense.
    x_cl = jnp.transpose(x_nchw, (1, 0, 2, 3)).reshape(C, L)

    w1p, w2p, w3p = _pack_w(w1), _pack_w(w2), _pack_w(w3)
    b1c, b2c, b3c = b1.reshape(-1, 1), b2.reshape(-1, 1), b3.reshape(-1, 1)
    cout = w3p.shape[1]

    shift_sign = -1 if _roll_matches_np_roll() else 1

    # Single grid-less pallas_call: every operand is one full VMEM block (total
    # footprint << 1 MiB), both intermediates stay on-chip, no grid-step
    # overhead.  (A grid=(2,) "parallel" lane split could use both v7x cores,
    # but at ~1 us of work the extra launch/weight-DMA bookkeeping likely wins.)
    out = pl.pallas_call(
        _make_fused_kernel(H, W, L, shift_sign),
        out_shape=jax.ShapeDtypeStruct((cout, L), jnp.float32),
    )(x_cl, w1p, b1c, w2p, b2c, w3p, b3c)

    return jnp.transpose(out.reshape(cout, N, H, W), (1, 0, 2, 3))


def init_params(key):
    """Deterministic init matching nn.Conv2d default (uniform +-1/sqrt(fan_in))."""
    keys = jax.random.split(key, 6)

    def conv_init(kw_, kb_, cin, cout):
        bound = 1.0 / jnp.sqrt(jnp.float32(cin * 9))
        w = jax.random.uniform(kw_, (3, 3, cin, cout), jnp.float32, -bound, bound)
        b = jax.random.uniform(kb_, (cout,), jnp.float32, -bound, bound)
        return w, b

    w1, b1 = conv_init(keys[0], keys[1], 3, 16)
    w2, b2 = conv_init(keys[2], keys[3], 16, 32)
    w3, b3 = conv_init(keys[4], keys[5], 32, 3)
    return (w1, b1, w2, b2, w3, b3)


def mask_weighs_reference(x_nchw, params):
    """Pure-JAX reference for verification."""
    w1, b1, w2, b2, w3, b3 = params

    def conv(x, w, b, act):
        y = jax.lax.conv_general_dilated(
            x, w, window_strides=(1, 1), padding="SAME",
            dimension_numbers=("NHWC", "HWIO", "NHWC"))
        return act(y + b)

    relu = lambda v: jnp.maximum(v, 0.0)
    x = jnp.transpose(x_nchw, (0, 2, 3, 1))
    x = conv(x, w1, b1, relu)
    x = conv(x, w2, b2, relu)
    x = conv(x, w3, b3, jax.nn.sigmoid)
    return jnp.transpose(x, (0, 3, 1, 2))


if __name__ == "__main__":
    key = jax.random.PRNGKey(0)
    k_params, k_x = jax.random.split(key)
    params = init_params(k_params)

    # PyTorch-style NCHW input: batch=2, channels=3, spatial=16x16.
    x = jax.random.normal(k_x, (2, 3, 16, 16), dtype=jnp.float32)

    out = jax.block_until_ready(mask_weighs_forward(x, params))
    ref = jax.block_until_ready(mask_weighs_reference(x, params))

    assert out.shape == (2, 3, 16, 16), out.shape
    assert jnp.allclose(out, ref, atol=1e-5, rtol=1e-5), "mismatch vs reference"

    print("KERNEL_OK")
</pallas_src>

<mosaic_0001>
module attributes {stable_mosaic.version = 11 : i64} {
  func.func @probe(%arg0: memref<1x128xf32, #tpu.memory_space<vmem>>, %arg1: memref<1x128xf32, #tpu.memory_space<vmem>>) attributes {dimension_semantics = [], scalar_prefetch = 0 : i64, scratch_operands = 0 : i64, tpu.core_type = #tpu.core_type<tc>} {
    %c0 = arith.constant 0 : index
    %c0_0 = arith.constant 0 : index
    %0 = vector.load %arg0[%c0, %c0_0] : memref<1x128xf32, #tpu.memory_space<vmem>>, vector<1x128xf32>
    %c1_i32 = arith.constant 1 : i32
    %1 = tpu.dynamic_rotate %0 by %c1_i32 dim 1 : vector<1x128xf32>, i32 -> vector<1x128xf32>
    %c0_1 = arith.constant 0 : index
    %c0_2 = arith.constant 0 : index
    %2 = vector.load %arg1[%c0_1, %c0_2] : memref<1x128xf32, #tpu.memory_space<vmem>>, vector<1x128xf32>
    tpu.vector_store %arg1[%c0_1, %c0_2], %1 {strides = array<i32>} : memref<1x128xf32, #tpu.memory_space<vmem>>, vector<1x128xf32>,
    return
  }
}

</mosaic_0001>

<llo_original>
// kernel: tpu_custom_call.1
$region0: #{tpu_custom_call.1}
  #allocation0 [shape = 'u32[]', space=smem, size = 0x4, offset = 0x4, fixed_abs, tag = 'smem constant byte address 0x4 - core index']
  #allocation1 [shape = 'u32[72,128]{1,0:T(1,128)}', space=vmem, size = 0x9000, scoped, tag = 'internal scratch']
  %s0 = inlined_call_operand.hbm [shape: f32[1,128], index: 0, kind: input, shape index: {}]
  %s1 = inlined_call_operand.hbm [shape: f32[1,128], index: 1, kind: output, shape index: {}]
  %s2 = sld [smem:[#allocation0]]
  $region18: #{tpu_custom_call.1} parent=0
    _
  %s4 = ssub.s32 1, %s2
  %s5 = scalar_select 0, %s4, %s2
  $region1: #{tpu_custom_call.1} parent=0
    #allocation2 [shape = 'u8[512]{0}', space=vmem, size = 0x400, scoped, tag = 'input window, operand 0, single buffered']
    #allocation3 [shape = 's32[1]{0}', space=sflag, size = 0x4, scoped, tag = 'scoped memory for tpu_custom_call.1']
    #allocation4 [shape = 's32[1]{0}', space=sflag, size = 0x4, scoped, tag = 'scoped memory for tpu_custom_call.1']
    #allocation5 [shape = 'u8[512]{0}', space=vmem, size = 0x400, scoped, tag = 'output window, operand 0, single buffered']
    %6 = vsyncpa [#allocation3], 0
    %7 = vsyncpa [#allocation4], 0
    // Predicated region
    $region2: #{tpu_custom_call.1} parent=1 // pred_check
      _
    $region3: #{tpu_custom_call.1} parent=1 // pred_check_branch
      %9 = sbr.rel (0) target = $region5
    $region4: #{tpu_custom_call.1} parent=1 // pred_region
      %11 = vsyncadd [#allocation3], 0
      %s13 = sshll.u32 %s0, 4
      %s14 = int_to_ptr.hbm [resolvable:$true] %s13
      %s15 = sshll.u32 [#allocation2], 4
      %s16 = int_to_ptr.vmem [resolvable:$true] %s15
      %18 = dma.hbm_to_vmem [thread:$0]  %s14, 16, %s16, [#allocation3]
    $region5: #{tpu_custom_call.1} parent=1 // pred_fallthru
      _
    // Predicated region
    $region6: #{tpu_custom_call.1} parent=1 // pred_check
      _
    $region7: #{tpu_custom_call.1} parent=1 // pred_check_branch
      %20 = sbr.rel (0) target = $region9
    $region8: #{tpu_custom_call.1} parent=1 // pred_region
      %22 = dma.done [#allocation3], 16
    $region9: #{tpu_custom_call.1} parent=1 // pred_fallthru
      _
    %v23 = vld [vmem:[#allocation2] sm:$0x1]
    %24 = vrot.lane.b32.xlu0 %v23, 1
    %v25 = vpop.permute.xlu0 %24
    %26 = vst [vmem:[#allocation5] sm:$0x1] %v25
    // Predicated region
    $region10: #{tpu_custom_call.1} parent=1 // pred_check
      _
    $region11: #{tpu_custom_call.1} parent=1 // pred_check_branch
      %28 = sbr.rel (0) target = $region13
    $region12: #{tpu_custom_call.1} parent=1 // pred_region
      %30 = vsyncadd [#allocation4], 0
      %s32 = sshll.u32 [#allocation5], 4
      %s33 = int_to_ptr.vmem [resolvable:$true] %s32
      %s34 = sshll.u32 %s1, 4
      %s35 = int_to_ptr.hbm [resolvable:$true] %s34
      %37 = dma.vmem_to_hbm [thread:$0]  %s33, 16, %s35, [#allocation4]
    $region13: #{tpu_custom_call.1} parent=1 // pred_fallthru
      _
    // Predicated region
    $region14: #{tpu_custom_call.1} parent=1 // pred_check
      _
    $region15: #{tpu_custom_call.1} parent=1 // pred_check_branch
      %39 = sbr.rel (0) target = $region17
    $region16: #{tpu_custom_call.1} parent=1 // pred_region
      %41 = dma.done [#allocation4], 16
    $region17: #{tpu_custom_call.1} parent=1 // pred_fallthru
      _
    %42 = vsyncpa [#allocation3], 1
    %43 = vsyncpa [#allocation4], 1

</llo_original>
